<compile_context>
chip_gen: v7x
topology: tpu7x:2x2x1
jax: 0.10.0
libtpu: 0.0.40
codegen_flags: <defaults>
</compile_context>

<pallas_src>
import jax
import jax.numpy as jnp
from jax.experimental import pallas as pl
from jax.experimental.pallas import tpu as pltpu


# ----------------------------------------------------------------------------
# Pallas kernel: fused encoder read-out (one voxel tile per grid step)
# ----------------------------------------------------------------------------
def encoder_kernel(f0_ref, f1_ref, f1daug_ref, rf0_ref, rf1_ref, wcat_ref, out_ref):
    B, tn = out_ref.shape
    C0 = f0_ref.shape[0] // B
    C1 = f1_ref.shape[0] // B
    N1 = f1daug_ref.shape[1]          # N_1d + 1 (trailing ones column -> bias)

    # merged weight slab rows: [w0 (C0) | w1 (C1) | w1d (N_1d) | bias (1)]
    w0 = wcat_ref[0:C0, :]                              # (C0, tn)
    w1 = wcat_ref[C0:C0 + C1, :]                        # (C1, tn)
    w1d_aug = wcat_ref[C0 + C1:C0 + C1 + N1, :]         # (N_1d + 1, tn)

    # 2d layer 0: one batched MXU matmul, then channel-weighted sublane reduce.
    p0 = jnp.dot(f0_ref[...], rf0_ref[...],
                 preferred_element_type=jnp.float32)    # (B*C0, tn)
    acc = jnp.sum(p0.reshape(B, C0, tn) * w0[None, :, :], axis=1)     # (B, tn)

    # 2d layer 1
    p1 = jnp.dot(f1_ref[...], rf1_ref[...],
                 preferred_element_type=jnp.float32)    # (B*C1, tn)
    acc = acc + jnp.sum(p1.reshape(B, C1, tn) * w1[None, :, :], axis=1)

    # 1d layer + bias in a single small matmul (ones column carries the bias)
    acc = acc + jnp.dot(f1daug_ref[...], w1d_aug,
                        preferred_element_type=jnp.float32)           # (B, tn)

    # single dense lane-aligned store
    out_ref[...] = acc.astype(out_ref.dtype)


# ----------------------------------------------------------------------------
# Wrapper: tiling / padding / pallas_call plumbing
# ----------------------------------------------------------------------------
def _pad_lanes(a, nv_pad):
    pad = nv_pad - a.shape[-1]
    if pad == 0:
        return a
    return jnp.pad(a, [(0, 0)] * (a.ndim - 1) + [(0, pad)])


def _pick_tn(nv_pad, max_tn=2048, min_grid=4):
    # Largest lane-aligned divisor of nv_pad, capped at max_tn, that keeps the
    # grid long enough (>= min_grid) to shard across v7x's two TensorCores.
    candidates = [t for t in range(128, min(max_tn, nv_pad) + 1, 128)
                  if nv_pad % t == 0]
    good = [t for t in candidates if nv_pad // t >= min_grid]
    return max(good) if good else min(candidates)


def encoder_readout(f0, f1, f1d_aug, rf0_flat, rf1_flat, wcat, nv, *, max_tn=2048):
    BC0, S0 = f0.shape
    BC1, S1 = f1.shape
    B, N1 = f1d_aug.shape
    W = wcat.shape[0]

    nv_pad = ((nv + 127) // 128) * 128
    rf0_p = _pad_lanes(rf0_flat, nv_pad)
    rf1_p = _pad_lanes(rf1_flat, nv_pad)
    wcat_p = _pad_lanes(wcat, nv_pad)

    tn = _pick_tn(nv_pad, max_tn=max_tn)
    grid = (nv_pad // tn,)

    # per-tile working set (streamed inputs + output, double buffered) plus the
    # grid-resident batch features; used to set an explicit scoped-VMEM limit.
    f32b = 4
    streamed = (S0 + S1 + W + B) * tn * f32b
    resident = (BC0 * S0 + BC1 * S1 + B * N1) * f32b
    vmem_est = 2 * streamed + 2 * resident
    vmem_limit = int(min(64 * 1024 * 1024, max(32 * 1024 * 1024, 2 * vmem_est)))

    out = pl.pallas_call(
        encoder_kernel,
        out_shape=jax.ShapeDtypeStruct((B, nv_pad), jnp.float32),
        grid_spec=pltpu.PrefetchScalarGridSpec(
            num_scalar_prefetch=0,
            grid=grid,
            in_specs=[
                # batch features: constant block index -> fetched once, reused
                pl.BlockSpec((BC0, S0), lambda j: (0, 0)),
                pl.BlockSpec((BC1, S1), lambda j: (0, 0)),
                pl.BlockSpec((B, N1), lambda j: (0, 0)),
                # streamed per-voxel-tile parameters
                pl.BlockSpec((S0, tn), lambda j: (0, j)),
                pl.BlockSpec((S1, tn), lambda j: (0, j)),
                pl.BlockSpec((W, tn), lambda j: (0, j)),
            ],
            out_specs=pl.BlockSpec((B, tn), lambda j: (0, j)),
        ),
        compiler_params=pltpu.CompilerParams(
            dimension_semantics=("parallel",),
            vmem_limit_bytes=vmem_limit,
        ),
    )(f0, f1, f1d_aug, rf0_p, rf1_p, wcat_p)
    return out[:, :nv]


# ----------------------------------------------------------------------------
# Plain-JAX glue: tiny deterministic stand-in backbone + feature selection
# TODO(synk): the original `model` is an arbitrary external feature extractor;
#             a 2-conv stand-in with ReLU + GAP is used here.
# ----------------------------------------------------------------------------
def conv2d_relu(x, w, b, stride):
    y = jax.lax.conv_general_dilated(
        x, w, window_strides=(stride, stride), padding="SAME",
        dimension_numbers=("NCHW", "OIHW", "NCHW"))
    return jax.nn.relu(y + b[None, :, None, None])


def backbone(x, params):
    h1 = conv2d_relu(x, params["conv1_w"], params["conv1_b"], 2)   # (B, 16, 8, 8)
    h2 = conv2d_relu(h1, params["conv2_w"], params["conv2_b"], 2)  # (B, 16, 4, 4)
    gap = jnp.mean(h2, axis=(2, 3))                                # (B, 16)
    return {"conv1": h1, "conv2": h2, "gap": gap}


def encoder_forward(x, params, cfg):
    feats = backbone(x, params)
    B = x.shape[0]
    Nv = cfg["Nv"]
    idx0 = jnp.asarray(cfg["channels_2d"]["conv1"])
    idx1 = jnp.asarray(cfg["channels_2d"]["conv2"])
    idx1d = jnp.asarray(cfg["channels_1d"]["gap"])
    C0, C1 = idx0.shape[0], idx1.shape[0]

    # flatten spatial dims and fold batch into the matmul M dimension on the
    # wrapper side (free relayout) -> one MXU op per 2d layer in the kernel
    f0 = feats["conv1"][:, idx0].reshape(B * C0, -1)               # (B*C0, S0)
    f1 = feats["conv2"][:, idx1].reshape(B * C1, -1)               # (B*C1, S1)
    f1d = feats["gap"][:, idx1d]                                   # (B, N1d)
    # ones column makes the bias part of the 1d matmul inside the kernel
    f1d_aug = jnp.concatenate(
        [f1d, jnp.ones((B, 1), f1d.dtype)], axis=1)                # (B, N1d+1)

    rf0_flat = params["rf0"].reshape(-1, Nv)                       # (S0, Nv)
    rf1_flat = params["rf1"].reshape(-1, Nv)                       # (S1, Nv)
    # merge all small per-channel weights + bias into one slab (single DMA)
    wcat = jnp.concatenate(
        [params["w_2d"], params["w_1d"], params["b"][None, :]], axis=0)

    return encoder_readout(f0, f1, f1d_aug, rf0_flat, rf1_flat, wcat, Nv)


def reference_forward(x, params, cfg):
    feats = backbone(x, params)
    B = x.shape[0]
    Nv = cfg["Nv"]
    idx0 = jnp.asarray(cfg["channels_2d"]["conv1"])
    idx1 = jnp.asarray(cfg["channels_2d"]["conv2"])
    idx1d = jnp.asarray(cfg["channels_1d"]["gap"])
    f0 = feats["conv1"][:, idx0].reshape(B, idx0.shape[0], -1)
    f1 = feats["conv2"][:, idx1].reshape(B, idx1.shape[0], -1)
    sigma_2d = jnp.concatenate(
        [jnp.matmul(f0, params["rf0"].reshape(-1, Nv)),
         jnp.matmul(f1, params["rf1"].reshape(-1, Nv))], axis=1)   # (B, N_2d, Nv)
    sigma_2d = (sigma_2d * params["w_2d"][None]).sum(1)            # (B, Nv)
    f1d = feats["gap"][:, idx1d]
    sigma_1d = (f1d[:, :, None] * params["w_1d"][None]).sum(1)     # (B, Nv)
    return sigma_2d + sigma_1d + params["b"][None, :]


# ----------------------------------------------------------------------------
if __name__ == "__main__":
    key = jax.random.PRNGKey(0)
    ks = jax.random.split(key, 10)

    B, Cin, H, W = 2, 3, 16, 16
    Nv = 2048                                   # voxel count (lane axis)
    cfg = dict(
        Nv=Nv,
        channels_2d={"conv1": list(range(0, 16, 2)),      # 8 channels
                     "conv2": list(range(1, 16, 2))},     # 8 channels
        channels_1d={"gap": list(range(0, 16, 2))},       # 8 channels
        res=[(8, 8), (4, 4)],
    )
    N_2d = len(cfg["channels_2d"]["conv1"]) + len(cfg["channels_2d"]["conv2"])  # 16
    N_1d = len(cfg["channels_1d"]["gap"])                                       # 8

    u = lambda k, s: jax.random.uniform(k, s, jnp.float32, -0.1, 0.1)
    params = {
        # stand-in backbone
        "conv1_w": u(ks[0], (16, Cin, 3, 3)),
        "conv1_b": u(ks[1], (16,)),
        "conv2_w": u(ks[2], (16, 16, 3, 3)),
        "conv2_b": u(ks[3], (16,)),
        # encoder parameters (same shapes as the PyTorch module)
        "rf0": u(ks[4], (8, 8, Nv)),          # rfs[0]: res[0] + (Nv,)
        "rf1": u(ks[5], (4, 4, Nv)),          # rfs[1]: res[1] + (Nv,)
        "w_2d": u(ks[6], (N_2d, Nv)),
        "w_1d": u(ks[7], (N_1d, Nv)),
        "b": jax.random.uniform(ks[8], (Nv,), jnp.float32, 0.0, 1.0),
    }

    x = jax.random.normal(ks[9], (B, Cin, H, W), jnp.float32)

    out = encoder_forward(x, params, cfg)
    out = jax.block_until_ready(out)

    ref = reference_forward(x, params, cfg)
    assert out.shape == (B, Nv)
    assert jnp.allclose(out, ref, rtol=1e-4, atol=1e-5), \
        float(jnp.max(jnp.abs(out - ref)))
    print("KERNEL_OK")
</pallas_src>

<mosaic_0001>
module attributes {stable_mosaic.version = 11 : i64} {
  func.func @encoder_kernel(%arg0: i32, %arg1: memref<16x64xf32, #tpu.memory_space<vmem>>, %arg2: memref<16x16xf32, #tpu.memory_space<vmem>>, %arg3: memref<2x9xf32, #tpu.memory_space<vmem>>, %arg4: memref<64x512xf32, #tpu.memory_space<vmem>>, %arg5: memref<16x512xf32, #tpu.memory_space<vmem>>, %arg6: memref<25x512xf32, #tpu.memory_space<vmem>>, %arg7: memref<2x512xf32, #tpu.memory_space<vmem>>) attributes {dimension_semantics = [#tpu.dimension_semantics<parallel>], iteration_bounds = array<i64: 4>, scalar_prefetch = 0 : i64, scratch_operands = 0 : i64, tpu.core_type = #tpu.core_type<tc>, window_params = [{pipeline_mode = #tpu.pipeline_mode<synchronous>, transform_indices = @transform_0, window_bounds = array<i64: 16, 64>}, {pipeline_mode = #tpu.pipeline_mode<synchronous>, transform_indices = @transform_1, window_bounds = array<i64: 16, 16>}, {pipeline_mode = #tpu.pipeline_mode<synchronous>, transform_indices = @transform_2, window_bounds = array<i64: 2, 9>}, {transform_indices = @transform_3, window_bounds = array<i64: 64, 512>}, {transform_indices = @transform_4, window_bounds = array<i64: 16, 512>}, {transform_indices = @transform_5, window_bounds = array<i64: 25, 512>}, {transform_indices = @transform_6, window_bounds = array<i64: 2, 512>}]} {
    %c0 = arith.constant 0 : index
    %c0_0 = arith.constant 0 : index
    %0 = vector.load %arg6[%c0, %c0_0] : memref<25x512xf32, #tpu.memory_space<vmem>>, vector<8x512xf32>
    %c8 = arith.constant 8 : index
    %c0_1 = arith.constant 0 : index
    %1 = vector.load %arg6[%c8, %c0_1] : memref<25x512xf32, #tpu.memory_space<vmem>>, vector<8x512xf32>
    %c16 = arith.constant 16 : index
    %c0_2 = arith.constant 0 : index
    %2 = vector.load %arg6[%c16, %c0_2] : memref<25x512xf32, #tpu.memory_space<vmem>>, vector<9x512xf32>
    %c0_3 = arith.constant 0 : index
    %c0_4 = arith.constant 0 : index
    %3 = vector.load %arg1[%c0_3, %c0_4] : memref<16x64xf32, #tpu.memory_space<vmem>>, vector<16x64xf32>
    %c0_5 = arith.constant 0 : index
    %c0_6 = arith.constant 0 : index
    %4 = vector.load %arg4[%c0_5, %c0_6] : memref<64x512xf32, #tpu.memory_space<vmem>>, vector<64x512xf32>
    %cst = arith.constant dense<0.000000e+00> : vector<16x512xf32>
    %5 = tpu.matmul %3, %4, %cst {dimension_numbers = #tpu.dot_dimension_numbers<[1], [0], [0], [1], [0, 0, 1, 1], [], []>} : vector<16x64xf32>, vector<64x512xf32>, vector<16x512xf32> -> vector<16x512xf32>
    %6 = vector.shape_cast %5 : vector<16x512xf32> to vector<2x8x512xf32>
    %7 = vector.shape_cast %0 : vector<8x512xf32> to vector<1x8x512xf32>
    %8 = vector.broadcast %7 : vector<1x8x512xf32> to vector<2x8x512xf32>
    %9 = arith.mulf %6, %8 : vector<2x8x512xf32>
    %cst_7 = arith.constant dense<0.000000e+00> : vector<2x512xf32>
    %10 = vector.multi_reduction <add>, %9, %cst_7 [1] : vector<2x8x512xf32> to vector<2x512xf32>
    %c0_8 = arith.constant 0 : index
    %c0_9 = arith.constant 0 : index
    %11 = vector.load %arg2[%c0_8, %c0_9] : memref<16x16xf32, #tpu.memory_space<vmem>>, vector<16x16xf32>
    %c0_10 = arith.constant 0 : index
    %c0_11 = arith.constant 0 : index
    %12 = vector.load %arg5[%c0_10, %c0_11] : memref<16x512xf32, #tpu.memory_space<vmem>>, vector<16x512xf32>
    %cst_12 = arith.constant dense<0.000000e+00> : vector<16x512xf32>
    %13 = tpu.matmul %11, %12, %cst_12 {dimension_numbers = #tpu.dot_dimension_numbers<[1], [0], [0], [1], [0, 0, 1, 1], [], []>} : vector<16x16xf32>, vector<16x512xf32>, vector<16x512xf32> -> vector<16x512xf32>
    %14 = vector.shape_cast %13 : vector<16x512xf32> to vector<2x8x512xf32>
    %15 = vector.shape_cast %1 : vector<8x512xf32> to vector<1x8x512xf32>
    %16 = vector.broadcast %15 : vector<1x8x512xf32> to vector<2x8x512xf32>
    %17 = arith.mulf %14, %16 : vector<2x8x512xf32>
    %cst_13 = arith.constant dense<0.000000e+00> : vector<2x512xf32>
    %18 = vector.multi_reduction <add>, %17, %cst_13 [1] : vector<2x8x512xf32> to vector<2x512xf32>
    %19 = arith.addf %10, %18 : vector<2x512xf32>
    %c0_14 = arith.constant 0 : index
    %c0_15 = arith.constant 0 : index
    %20 = vector.load %arg3[%c0_14, %c0_15] : memref<2x9xf32, #tpu.memory_space<vmem>>, vector<2x9xf32>
    %cst_16 = arith.constant dense<0.000000e+00> : vector<2x512xf32>
    %21 = tpu.matmul %20, %2, %cst_16 {dimension_numbers = #tpu.dot_dimension_numbers<[1], [0], [0], [1], [0, 0, 1, 1], [], []>} : vector<2x9xf32>, vector<9x512xf32>, vector<2x512xf32> -> vector<2x512xf32>
    %22 = arith.addf %19, %21 : vector<2x512xf32>
    %c0_17 = arith.constant 0 : index
    %c0_18 = arith.constant 0 : index
    %23 = vector.load %arg7[%c0_17, %c0_18] : memref<2x512xf32, #tpu.memory_space<vmem>>, vector<2x512xf32>
    tpu.vector_store %arg7[%c0_17, %c0_18], %22 {strides = array<i32>} : memref<2x512xf32, #tpu.memory_space<vmem>>, vector<2x512xf32>,
    return
  }
  func.func @transform_0(%arg0: i32) -> (i32, i32) {
    %c0_i32 = arith.constant 0 : i32
    %c0_i32_0 = arith.constant 0 : i32
    %c0_i32_1 = arith.constant 0 : i32
    return %c0_i32, %c0_i32_0 : i32, i32
  }
  func.func @transform_1(%arg0: i32) -> (i32, i32) {
    %c0_i32 = arith.constant 0 : i32
    %c0_i32_0 = arith.constant 0 : i32
    %c0_i32_1 = arith.constant 0 : i32
    return %c0_i32, %c0_i32_0 : i32, i32
  }
  func.func @transform_2(%arg0: i32) -> (i32, i32) {
    %c0_i32 = arith.constant 0 : i32
    %c0_i32_0 = arith.constant 0 : i32
    %c0_i32_1 = arith.constant 0 : i32
    return %c0_i32, %c0_i32_0 : i32, i32
  }
  func.func @transform_3(%arg0: i32) -> (i32, i32) {
    %c0_i32 = arith.constant 0 : i32
    %c0_i32_0 = arith.constant 0 : i32
    return %c0_i32, %arg0 : i32, i32
  }
  func.func @transform_4(%arg0: i32) -> (i32, i32) {
    %c0_i32 = arith.constant 0 : i32
    %c0_i32_0 = arith.constant 0 : i32
    return %c0_i32, %arg0 : i32, i32
  }
  func.func @transform_5(%arg0: i32) -> (i32, i32) {
    %c0_i32 = arith.constant 0 : i32
    %c0_i32_0 = arith.constant 0 : i32
    return %c0_i32, %arg0 : i32, i32
  }
  func.func @transform_6(%arg0: i32) -> (i32, i32) {
    %c0_i32 = arith.constant 0 : i32
    %c0_i32_0 = arith.constant 0 : i32
    return %c0_i32, %arg0 : i32, i32
  }
}

</mosaic_0001>

<llo_original>
// kernel: tpu_custom_call.1
$region0: #{tpu_custom_call.1}
  #allocation0 [shape = 'u32[]', space=smem, size = 0x4, offset = 0x4, fixed_abs, tag = 'smem constant byte address 0x4 - core index']
  #allocation1 [shape = 'u32[144,128]{1,0:T(1,128)}', space=vmem, size = 0x12000, scoped, tag = 'internal scratch']
  %s0 = inlined_call_operand.hbm [shape: f32[16,64], index: 0, kind: input, shape index: {}]
  %s1 = inlined_call_operand.hbm [shape: f32[16,16], index: 1, kind: input, shape index: {}]
  %s2 = inlined_call_operand.vmem [shape: f32[2,9], index: 2, kind: input, shape index: {}]
  %s3 = inlined_call_operand.hbm [shape: f32[64,2048], index: 3, kind: input, shape index: {}]
  %s4 = inlined_call_operand.hbm [shape: f32[16,2048], index: 4, kind: input, shape index: {}]
  %s5 = inlined_call_operand.hbm [shape: f32[25,2048], index: 5, kind: input, shape index: {}]
  %s6 = inlined_call_operand.hbm [shape: f32[2,2048], index: 6, kind: output, shape index: {}]
  %s7 = sld [smem:[#allocation0]]
  $region77: #{tpu_custom_call.1} parent=0
    _
  %s9 = ssub.s32 1, %s7
  %s10 = scalar_select 0, %s9, %s7
  $region1: #{tpu_custom_call.1} parent=0
    #allocation2 [shape = 'u8[8192]{0}', space=vmem, size = 0x2000, scoped, tag = 'input window, operand 0, single buffered']
    #allocation3 [shape = 's32[2]{0}', space=sflag, size = 0x8, scoped, tag = 'scoped memory for tpu_custom_call.1']
    #allocation4 [shape = 's32[2]{0}', space=sflag, size = 0x8, scoped, tag = 'scoped memory for tpu_custom_call.1']
    #allocation5 [shape = 'u8[8192]{0}', space=vmem, size = 0x2000, scoped, tag = 'input window, operand 1, single buffered']
    #allocation6 [shape = 's32[1]{0}', space=sflag, size = 0x4, scoped, tag = 'scoped memory for tpu_custom_call.1']
    #allocation7 [shape = 'u8[262144]{0}', space=vmem, size = 0x40000, scoped, tag = 'input window, operand 3']
    #allocation8 [shape = 'u8[65536]{0}', space=vmem, size = 0x10000, scoped, tag = 'input window, operand 4']
    #allocation9 [shape = 'u8[131072]{0}', space=vmem, size = 0x20000, scoped, tag = 'input window, operand 5']
    #allocation10 [shape = 'u8[8192]{0}', space=vmem, size = 0x2000, scoped, tag = 'output window, operand 0']
    %11 = vsyncpa [#allocation3], 0
    %12 = vsyncpa [#allocation6], 0
    %13 = vsyncpa [#allocation4], 0
    %s14 = scalar_lea.sflag [#allocation4], 1
    %15 = vsyncpa %s14, 0
    loop: start=0, step=1, limit=6
    $region2: #{tpu_custom_call.1} parent=1 // loop_pre_header
      _
    $region3: #{tpu_custom_call.1} parent=1 // loop_header
      %s17 = sphi 0, %s21
      %p18 = scmp.ge.s32.totalorder %s17, 6
      %s25 = sphi 0, %s25
      %s27 = sphi 0, %s25
      %s28 = sphi 0, %s27
      %s42 = sphi 0, %s28
      %s46 = sphi 0, %s46
      %s48 = sphi 0, %s46
      %s49 = sphi 0, %s48
      %s63 = sphi 0, %s49
      %s67 = sphi 0, %s67
      %s69 = sphi 0, %s67
      %s70 = sphi 0, %s69
      %s84 = sphi 0, %s70
      %s90 = sphi 0, %s92
      %s93 = sphi 0, %s90
      %s94 = sphi 0, %s93
      %s110 = sphi 0, %s94
      %s116 = sphi 0, %s118
      %s119 = sphi 0, %s116
      %s120 = sphi 0, %s119
      %s136 = sphi 0, %s120
      %s142 = sphi 0, %s144
      %s145 = sphi 0, %s142
      %s146 = sphi 0, %s145
      %s162 = sphi 0, %s146
      %s168 = sphi 0, %s170
      %s171 = sphi 0, %s168
      %s172 = sphi 0, %s171
      %s188 = sphi 0, %s172
    $region4: #{tpu_custom_call.1} parent=1 // loop_header_branch
      %20 = sbr.rel (%p18) target = $region8
    $region5: #{tpu_custom_call.1} parent=1 // loop_body
      %s22 = ssub.s32 %s17, 1
      %s23 = ssub.s32 %s17, 2
      %s24 = sadd.s32 %s17, 1
      %s26 = sadd.s32 %s25, 1
      %p29 = scmp.eq.s32.totalorder %s17, 3
      %p30 = scmp.ne.s32.totalorder %s25, %s27
      %p31 = scmp.eq.s32.totalorder %s17, 0
      %p32 = por %p30, %p31
      %p33 = scmp.ne.s32.totalorder %s25, %s27
      %p34 = scmp.eq.s32.totalorder %s22, 3
      %p35 = por %p33, %p34
      %p36 = scmp.ne.s32.totalorder %s27, %s28
      %p37 = scmp.eq.s32.totalorder %s22, 0
      %p38 = por %p36, %p37
      %p39 = scmp.ne.s32.totalorder %s27, %s28
      %p40 = scmp.eq.s32.totalorder %s23, 3
      %p41 = por %p39, %p40
      %p43 = scmp.ne.s32.totalorder %s28, %s42
      %p44 = scmp.eq.s32.totalorder %s23, 0
      %p45 = por %p43, %p44
      %s47 = sadd.s32 %s46, 1
      %p50 = scmp.eq.s32.totalorder %s17, 3
      %p51 = scmp.ne.s32.totalorder %s46, %s48
      %p52 = scmp.eq.s32.totalorder %s17, 0
      %p53 = por %p51, %p52
      %p54 = scmp.ne.s32.totalorder %s46, %s48
      %p55 = scmp.eq.s32.totalorder %s22, 3
      %p56 = por %p54, %p55
      %p57 = scmp.ne.s32.totalorder %s48, %s49
      %p58 = scmp.eq.s32.totalorder %s22, 0
      %p59 = por %p57, %p58
      %p60 = scmp.ne.s32.totalorder %s48, %s49
      %p61 = scmp.eq.s32.totalorder %s23, 3
      %p62 = por %p60, %p61
      %p64 = scmp.ne.s32.totalorder %s49, %s63
      %p65 = scmp.eq.s32.totalorder %s23, 0
      %p66 = por %p64, %p65
      %s68 = sadd.s32 %s67, 1
      %p71 = scmp.eq.s32.totalorder %s17, 3
      %p72 = scmp.ne.s32.totalorder %s67, %s69
      %p73 = scmp.eq.s32.totalorder %s17, 0
      %p74 = por %p72, %p73
      %p75 = scmp.ne.s32.totalorder %s67, %s69
      %p76 = scmp.eq.s32.totalorder %s22, 3
      %p77 = por %p75, %p76
      %p78 = scmp.ne.s32.totalorder %s69, %s70
      %p79 = scmp.eq.s32.totalorder %s22, 0
      %p80 = por %p78, %p79
      %p81 = scmp.ne.s32.totalorder %s69, %s70
      %p82 = scmp.eq.s32.totalorder %s23, 3
      %p83 = por %p81, %p82
      %p85 = scmp.ne.s32.totalorder %s70, %s84
      %p86 = scmp.eq.s32.totalorder %s23, 0
      %p87 = por %p85, %p86
      %s88 = ssub.s32 %s17, %s24
      %p89 = scmp.eq.s32.totalorder %s88, 0
      %s91 = sadd.s32 %s90, 1
      %s92 = scalar_select %p89, %s90, %s91
      %p95 = pneg %p89
      %p96 = scmp.eq.s32.totalorder %s17, 3
      %p97 = por %p95, %p96
      %p98 = scmp.ne.s32.totalorder %s90, %s93
      %p99 = scmp.eq.s32.totalorder %s17, 0
      %p100 = por %p98, %p99
      %p101 = scmp.ne.s32.totalorder %s90, %s93
      %p102 = scmp.eq.s32.totalorder %s22, 3
      %p103 = por %p101, %p102
      %p104 = scmp.ne.s32.totalorder %s93, %s94
      %p105 = scmp.eq.s32.totalorder %s22, 0
      %p106 = por %p104, %p105
      %p107 = scmp.ne.s32.totalorder %s93, %s94
      %p108 = scmp.eq.s32.totalorder %s23, 3
      %p109 = por %p107, %p108
      %p111 = scmp.ne.s32.totalorder %s94, %s110
      %p112 = scmp.eq.s32.totalorder %s23, 0
      %p113 = por %p111, %p112
      %s114 = ssub.s32 %s17, %s24
      %p115 = scmp.eq.s32.totalorder %s114, 0
      %s117 = sadd.s32 %s116, 1
      %s118 = scalar_select %p115, %s116, %s117
      %p121 = pneg %p115
      %p122 = scmp.eq.s32.totalorder %s17, 3
      %p123 = por %p121, %p122
      %p124 = scmp.ne.s32.totalorder %s116, %s119
      %p125 = scmp.eq.s32.totalorder %s17, 0
      %p126 = por %p124, %p125
      %p127 = scmp.ne.s32.totalorder %s116, %s119
      %p128 = scmp.eq.s32.totalorder %s22, 3
      %p129 = por %p127, %p128
      %p130 = scmp.ne.s32.totalorder %s119, %s120
      %p131 = scmp.eq.s32.totalorder %s22, 0
      %p132 = por %p130, %p131
      %p133 = scmp.ne.s32.totalorder %s119, %s120
      %p134 = scmp.eq.s32.totalorder %s23, 3
      %p135 = por %p133, %p134
      %p137 = scmp.ne.s32.totalorder %s120, %s136
      %p138 = scmp.eq.s32.totalorder %s23, 0
      %p139 = por %p137, %p138
      %s140 = ssub.s32 %s17, %s24
      %p141 = scmp.eq.s32.totalorder %s140, 0
      %s143 = sadd.s32 %s142, 1
      %s144 = scalar_select %p141, %s142, %s143
      %p147 = pneg %p141
      %p148 = scmp.eq.s32.totalorder %s17, 3
      %p149 = por %p147, %p148
      %p150 = scmp.ne.s32.totalorder %s142, %s145
      %p151 = scmp.eq.s32.totalorder %s17, 0
      %p152 = por %p150, %p151
      %p153 = scmp.ne.s32.totalorder %s142, %s145
      %p154 = scmp.eq.s32.totalorder %s22, 3
      %p155 = por %p153, %p154
      %p156 = scmp.ne.s32.totalorder %s145, %s146
      %p157 = scmp.eq.s32.totalorder %s22, 0
      %p158 = por %p156, %p157
      %p159 = scmp.ne.s32.totalorder %s145, %s146
      %p160 = scmp.eq.s32.totalorder %s23, 3
      %p161 = por %p159, %p160
      %p163 = scmp.ne.s32.totalorder %s146, %s162
      %p164 = scmp.eq.s32.totalorder %s23, 0
      %p165 = por %p163, %p164
      %s166 = ssub.s32 %s17, %s24
      %p167 = scmp.eq.s32.totalorder %s166, 0
      %s169 = sadd.s32 %s168, 1
      %s170 = scalar_select %p167, %s168, %s169
      %p173 = pneg %p167
      %p174 = scmp.eq.s32.totalorder %s17, 3
      %p175 = por %p173, %p174
      %p176 = scmp.ne.s32.totalorder %s168, %s171
      %p177 = scmp.eq.s32.totalorder %s17, 0
      %p178 = por %p176, %p177
      %p179 = scmp.ne.s32.totalorder %s168, %s171
      %p180 = scmp.eq.s32.totalorder %s22, 3
      %p181 = por %p179, %p180
      %p182 = scmp.ne.s32.totalorder %s171, %s172
      %p183 = scmp.eq.s32.totalorder %s22, 0
      %p184 = por %p182, %p183
      %p185 = scmp.ne.s32.totalorder %s171, %s172
      %p186 = scmp.eq.s32.totalorder %s23, 3
      %p187 = por %p185, %p186
      %p189 = scmp.ne.s32.totalorder %s172, %s188
      %p190 = scmp.eq.s32.totalorder %s23, 0
      %p191 = por %p189, %p190
      %p192 = scmp.le.s32.totalorder 1, %s17
      %p193 = scmp.lt.s32.totalorder %s17, 5
      %p194 = pnand %p192, %p193
      %p195 = pneg %p194
      // Predicated region
      $region9: #{tpu_custom_call.1} parent=5 // pred_check
        _
      $region10: #{tpu_custom_call.1} parent=5 // pred_check_branch
        %197 = sbr.rel (%p194) target = $region12
      $region11: #{tpu_custom_call.1} parent=5 // pred_region
        %s198 = ssub.s32 %s17, 1
        // Predicated region
        $region13: #{tpu_custom_call.1} parent=11 // pred_check
          %p199 = pneg %p38
        $region14: #{tpu_custom_call.1} parent=11 // pred_check_branch
          %201 = sbr.rel (%p199) target = $region16
        $region15: #{tpu_custom_call.1} parent=11 // pred_region
          %s203 = ssub.s32 256, 256
          %204 = vsyncadd [#allocation3], %s203
          %s205 = sshll.u32 [#allocation2], 4
          %s206 = int_to_ptr.vmem [resolvable:$true] %s205
          %211 = dma.hbm_to_vmem [thread:$0]  %s0, 256, %s206, [#allocation3], 128, 128, 8
        $region16: #{tpu_custom_call.1} parent=11 // pred_fallthru
          _
        // Predicated region
        $region17: #{tpu_custom_call.1} parent=11 // pred_check
          %p212 = pneg %p59
        $region18: #{tpu_custom_call.1} parent=11 // pred_check_branch
          %214 = sbr.rel (%p212) target = $region20
        $region19: #{tpu_custom_call.1} parent=11 // pred_region
          %s216 = ssub.s32 256, 256
          %217 = vsyncadd [#allocation6], %s216
          %s218 = sshll.u32 [#allocation5], 4
          %s219 = int_to_ptr.vmem [resolvable:$true] %s218
          %224 = dma.hbm_to_vmem [thread:$0]  %s1, 256, %s219, [#allocation6], 128, 128, 8
        $region20: #{tpu_custom_call.1} parent=11 // pred_fallthru
          _
        // Predicated region
        $region21: #{tpu_custom_call.1} parent=11 // pred_check
          %p225 = pneg %p80
        $region22: #{tpu_custom_call.1} parent=11 // pred_check_branch
          %227 = sbr.rel (%p225) target = $region24
        $region23: #{tpu_custom_call.1} parent=11 // pred_region
          _
        $region24: #{tpu_custom_call.1} parent=11 // pred_fallthru
          _
      $region12: #{tpu_custom_call.1} parent=5 // pred_fallthru
        _
      %p228 = scmp.lt.s32.totalorder %s17, 4
      // Predicated region
      $region25: #{tpu_custom_call.1} parent=5 // pred_check
        %p229 = pneg %p228
      $region26: #{tpu_custom_call.1} parent=5 // pred_check_branch
        %231 = sbr.rel (%p229) target = $region28
      $region27: #{tpu_custom_call.1} parent=5 // pred_region
        // Predicated region
        $region29: #{tpu_custom_call.1} parent=27 // pred_check
          %p232 = pneg %p100
        $region30: #{tpu_custom_call.1} parent=27 // pred_check_branch
          %234 = sbr.rel (%p232) target = $region32
        $region31: #{tpu_custom_call.1} parent=27 // pred_region
          %s235 = sand.u32 %s17, 1
          %s236 = scalar_lea.sflag [#allocation3], %s235
          %s237 = sand.u32 %s90, 1
          %s238 = smul.addr %s237, 256
          %s239 = scalar_lea.vmem [#allocation7], %s238
          %s240 = smul.u32 4, %s17
          %s242 = ssub.s32 4096, 4096
          %243 = vsyncadd %s236, %s242
          %s244 = smul.addr %s240, 128
          %s245 = scalar_lea.hbm %s3, %s244
          %s246 = sshll.u32 %s239, 4
          %s247 = int_to_ptr.vmem [resolvable:$true] %s246
          %252 = dma.hbm_to_vmem [thread:$0]  %s245, 4096, %s247, %s236, 2048, 512, 32
        $region32: #{tpu_custom_call.1} parent=27 // pred_fallthru
          _
        // Predicated region
        $region33: #{tpu_custom_call.1} parent=27 // pred_check
          %p253 = pneg %p126
        $region34: #{tpu_custom_call.1} parent=27 // pred_check_branch
          %255 = sbr.rel (%p253) target = $region36
        $region35: #{tpu_custom_call.1} parent=27 // pred_region
          %s256 = sand.u32 %s17, 1
          %s257 = scalar_lea.sflag [#allocation3], %s256
          %s258 = sand.u32 %s116, 1
          %s259 = smul.addr %s258, 64
          %s260 = scalar_lea.vmem [#allocation8], %s259
          %s261 = smul.u32 4, %s17
          %s263 = ssub.s32 1024, 1024
          %264 = vsyncadd %s257, %s263
          %s265 = smul.addr %s261, 128
          %s266 = scalar_lea.hbm %s4, %s265
          %s267 = sshll.u32 %s260, 4
          %s268 = int_to_ptr.vmem [resolvable:$true] %s267
          %273 = dma.hbm_to_vmem [thread:$0]  %s266, 1024, %s268, %s257, 2048, 512, 32
        $region36: #{tpu_custom_call.1} parent=27 // pred_fallthru
          _
        // Predicated region
        $region37: #{tpu_custom_call.1} parent=27 // pred_check
          %p274 = pneg %p152
        $region38: #{tpu_custom_call.1} parent=27 // pred_check_branch
          %276 = sbr.rel (%p274) target = $region40
        $region39: #{tpu_custom_call.1} parent=27 // pred_region
          %s277 = sand.u32 %s17, 1
          %s278 = scalar_lea.sflag [#allocation3], %s277
          %s279 = sand.u32 %s142, 1
          %s280 = smul.addr %s279, 128
          %s281 = scalar_lea.vmem [#allocation9], %s280
          %s282 = smul.u32 4, %s17
          %s284 = ssub.s32 2048, 2048
          %285 = vsyncadd %s278, %s284
          %s286 = smul.addr %s282, 128
          %s287 = scalar_lea.hbm %s5, %s286
          %s288 = sshll.u32 %s281, 4
          %s289 = int_to_ptr.vmem [resolvable:$true] %s288
          %294 = dma.hbm_to_vmem [thread:$0]  %s287, 2048, %s289, %s278, 2048, 512, 32
        $region40: #{tpu_custom_call.1} parent=27 // pred_fallthru
          _
      $region28: #{tpu_custom_call.1} parent=5 // pred_fallthru
        _
      %p295 = scmp.le.s32.totalorder 1, %s17
      %p296 = scmp.lt.s32.totalorder %s17, 5
      %p297 = pnand %p295, %p296
      %p298 = pneg %p297
      // Predicated region
      $region41: #{tpu_custom_call.1} parent=5 // pred_check
        _
      $region42: #{tpu_custom_call.1} parent=5 // pred_check_branch
        %300 = sbr.rel (%p297) target = $region44
      $region43: #{tpu_custom_call.1} parent=5 // pred_region
        %s301 = ssub.s32 %s17, 1
        // Predicated region
        $region45: #{tpu_custom_call.1} parent=43 // pred_check
          %p302 = pneg %p38
        $region46: #{tpu_custom_call.1} parent=43 // pred_check_branch
          %304 = sbr.rel (%p302) target = $region48
        $region47: #{tpu_custom_call.1} parent=43 // pred_region
          %305 = dma.done [#allocation3], 256
        $region48: #{tpu_custom_call.1} parent=43 // pred_fallthru
          _
        // Predicated region
        $region49: #{tpu_custom_call.1} parent=43 // pred_check
          %p306 = pneg %p59
        $region50: #{tpu_custom_call.1} parent=43 // pred_check_branch
          %308 = sbr.rel (%p306) target = $region52
        $region51: #{tpu_custom_call.1} parent=43 // pred_region
          %309 = dma.done [#allocation6], 256
        $region52: #{tpu_custom_call.1} parent=43 // pred_fallthru
          _
        %s310 = sand.u32 %s22, 1
        %s311 = scalar_lea.sflag [#allocation3], %s310
        %s312 = sand.u32 %s93, 1
        %s313 = smul.addr %s312, 256
        %s314 = scalar_lea.vmem [#allocation7], %s313
        // Predicated region
        $region53: #{tpu_custom_call.1} parent=43 // pred_check
          %p315 = pneg %p106
        $region54: #{tpu_custom_call.1} parent=43 // pred_check_branch
          %317 = sbr.rel (%p315) target = $region56
        $region55: #{tpu_custom_call.1} parent=43 // pred_region
          %318 = dma.done %s311, 4096
        $region56: #{tpu_custom_call.1} parent=43 // pred_fallthru
          _
        %s319 = sand.u32 %s22, 1
        %s320 = scalar_lea.sflag [#allocation3], %s319
        %s321 = sand.u32 %s119, 1
        %s322 = smul.addr %s321, 64
        %s323 = scalar_lea.vmem [#allocation8], %s322
        // Predicated region
        $region57: #{tpu_custom_call.1} parent=43 // pred_check
          %p324 = pneg %p132
        $region58: #{tpu_custom_call.1} parent=43 // pred_check_branch
          %326 = sbr.rel (%p324) target = $region60
        $region59: #{tpu_custom_call.1} parent=43 // pred_region
          %327 = dma.done %s320, 1024
        $region60: #{tpu_custom_call.1} parent=43 // pred_fallthru
          _
        %s328 = sand.u32 %s22, 1
        %s329 = scalar_lea.sflag [#allocation3], %s328
        %s330 = sand.u32 %s145, 1
        %s331 = smul.addr %s330, 128
        %s332 = scalar_lea.vmem [#allocation9], %s331
        // Predicated region
        $region61: #{tpu_custom_call.1} parent=43 // pred_check
          %p333 = pneg %p158
        $region62: #{tpu_custom_call.1} parent=43 // pred_check_branch
          %335 = sbr.rel (%p333) target = $region64
        $region63: #{tpu_custom_call.1} parent=43 // pred_region
          %336 = dma.done %s329, 2048
        $region64: #{tpu_custom_call.1} parent=43 // pred_fallthru
          _
        %p337 = pneg %p38
        %p338 = pneg %p35
        %p339 = pneg %p59
        %p340 = pneg %p56
        %p341 = pneg %p80
        %p342 = pneg %p77
        %s343 = sand.u32 %s22, 1
        %s344 = scalar_lea.sflag [#allocation3], %s343
        %s345 = sand.u32 %s93, 1
        %s346 = smul.addr %s345, 256
        %s347 = scalar_lea.vmem [#allocation7], %s346
        %p348 = pneg %p106
        %p349 = pneg %p103
        %s350 = sand.u32 %s22, 1
        %s351 = scalar_lea.sflag [#allocation3], %s350
        %s352 = sand.u32 %s119, 1
        %s353 = smul.addr %s352, 64
        %s354 = scalar_lea.vmem [#allocation8], %s353
        %p355 = pneg %p132
        %p356 = pneg %p129
        %s357 = sand.u32 %s22, 1
        %s358 = scalar_lea.sflag [#allocation3], %s357
        %s359 = sand.u32 %s145, 1
        %s360 = smul.addr %s359, 128
        %s361 = scalar_lea.vmem [#allocation9], %s360
        %p362 = pneg %p158
        %p363 = pneg %p155
        %p364 = pneg %p184
        %p365 = pneg %p181
        %s366 = sand.u32 %s171, 1
        %s367 = scalar_lea.sflag [#allocation4], %s366
        %s368 = sand.u32 %s171, 1
        %s369 = smul.addr %s368, 8
        %s370 = scalar_lea.vmem [#allocation10], %s369
        %s371 = smul.u32 4, %s22
        %s372 = smul.u32 4, %s22
        %s373 = smul.u32 4, %s22
        %s374 = smul.u32 4, %s22
        %v375 = vld [vmem:[%s332] sm:$0xff]
        %v376 = vld [vmem:[%s332 + $0x8] sm:$0xff]
        %v377 = vld [vmem:[%s332 + $0x10] sm:$0xff]
        %v378 = vld [vmem:[%s332 + $0x18] sm:$0xff]
        %v379 = vld [vmem:[%s332 + $0x20] sm:$0xff]
        %v380 = vld [vmem:[%s332 + $0x28] sm:$0xff]
        %v381 = vld [vmem:[%s332 + $0x30] sm:$0xff]
        %v382 = vld [vmem:[%s332 + $0x38] sm:$0xff]
        %v383 = vld [vmem:[%s332 + $0x40] sm:$0xff]
        %v384 = vld [vmem:[%s332 + $0x48] sm:$0xff]
        %v385 = vld [vmem:[%s332 + $0x50] sm:$0xff]
        %v386 = vld [vmem:[%s332 + $0x58] sm:$0xff]
        %v387 = vld [vmem:[%s332 + $0x60] sm:$0x1]
        %v388 = vld [vmem:[%s332 + $0x68] sm:$0x1]
        %v389 = vld [vmem:[%s332 + $0x70] sm:$0x1]
        %v390 = vld [vmem:[%s332 + $0x78] sm:$0x1]
        %v391 = vld [vmem:[#allocation2] sm:$0xff]
        %v392 = vld [vmem:[#allocation2 + $0x8] sm:$0xff]
        %v393 = vld [vmem:[%s314] sm:$0xff]
        %v394 = vld [vmem:[%s314 + $0x8] sm:$0xff]
        %v395 = vld [vmem:[%s314 + $0x10] sm:$0xff]
        %v396 = vld [vmem:[%s314 + $0x18] sm:$0xff]
        %v397 = vld [vmem:[%s314 + $0x20] sm:$0xff]
        %v398 = vld [vmem:[%s314 + $0x28] sm:$0xff]
        %v399 = vld [vmem:[%s314 + $0x30] sm:$0xff]
        %v400 = vld [vmem:[%s314 + $0x38] sm:$0xff]
        %v401 = vld [vmem:[%s314 + $0x40] sm:$0xff]
        %v402 = vld [vmem:[%s314 + $0x48] sm:$0xff]
        %v403 = vld [vmem:[%s314 + $0x50] sm:$0xff]
        %v404 = vld [vmem:[%s314 + $0x58] sm:$0xff]
        %v405 = vld [vmem:[%s314 + $0x60] sm:$0xff]
        %v406 = vld [vmem:[%s314 + $0x68] sm:$0xff]
        %v407 = vld [vmem:[%s314 + $0x70] sm:$0xff]
        %v408 = vld [vmem:[%s314 + $0x78] sm:$0xff]
        %v409 = vld [vmem:[%s314 + $0x80] sm:$0xff]
        %v410 = vld [vmem:[%s314 + $0x88] sm:$0xff]
        %v411 = vld [vmem:[%s314 + $0x90] sm:$0xff]
        %v412 = vld [vmem:[%s314 + $0x98] sm:$0xff]
        %v413 = vld [vmem:[%s314 + $0xa0] sm:$0xff]
        %v414 = vld [vmem:[%s314 + $0xa8] sm:$0xff]
        %v415 = vld [vmem:[%s314 + $0xb0] sm:$0xff]
        %v416 = vld [vmem:[%s314 + $0xb8] sm:$0xff]
        %v417 = vld [vmem:[%s314 + $0xc0] sm:$0xff]
        %v418 = vld [vmem:[%s314 + $0xc8] sm:$0xff]
        %v419 = vld [vmem:[%s314 + $0xd0] sm:$0xff]
        %v420 = vld [vmem:[%s314 + $0xd8] sm:$0xff]
        %v421 = vld [vmem:[%s314 + $0xe0] sm:$0xff]
        %v422 = vld [vmem:[%s314 + $0xe8] sm:$0xff]
        %v423 = vld [vmem:[%s314 + $0xf0] sm:$0xff]
        %v424 = vld [vmem:[%s314 + $0xf8] sm:$0xff]
        %vm425 = vcmask 523264
        %v427 = vsel %vm425, %v391, 0
        %v430 = vsel %vm425, %v392, 0
        %432 = vmatprep.subr.mxu0 %v394
        %433 = vmatpush1.msra.mxu0 %v393
        %434 = vmatprep.subr.mxu0 %v398
        %435 = vmatpush1.msra.mxu0 %v397
        %436 = vmatprep.subr.mxu0 %v402
        %437 = vmatpush1.msra.mxu0 %v401
        %438 = vmatprep.subr.mxu0 %v406
        %439 = vmatpush1.msra.mxu0 %v405
        %440 = vmatprep.subr.mxu0 %v410
        %441 = vmatpush1.msra.mxu0 %v409
        %442 = vmatprep.subr.mxu0 %v414
        %443 = vmatpush1.msra.mxu0 %v413
        %444 = vmatprep.subr.mxu0 %v418
        %445 = vmatpush1.msra.mxu0 %v417
        %446 = vmatprep.subr.mxu0 %v422
        %447 = vmatpush1.msra.mxu0 %v421
        %448 = vmatprep.subr.mxu0 0.0
        %449 = vmatpush1.msra.mxu0 0.0
        %450 = vmatprep.subr.mxu0 0.0
        %451 = vmatpush1.msra.mxu0 0.0
        %452 = vmatprep.subr.mxu0 0.0
        %453 = vmatpush1.msra.mxu0 0.0
        %454 = vmatprep.subr.mxu0 0.0
        %455 = vmatpush1.msra.mxu0 0.0
        %456 = vmatprep.subr.mxu0 0.0
        %457 = vmatpush1.msra.mxu0 0.0
        %458 = vmatprep.subr.mxu0 0.0
        %459 = vmatpush1.msra.mxu0 0.0
        %460 = vmatprep.subr.mxu0 0.0
        %461 = vmatpush1.msra.mxu0 0.0
        %462 = vmatprep.subr.mxu0 0.0
        %463 = vmatpush1.msra.mxu0 0.0
        %464 = vmatprep.subr.mxu0 0.0
        %465 = vmatpush1.msra.mxu0 0.0
        %466 = vmatprep.subr.mxu0 0.0
        %467 = vmatpush1.msra.mxu0 0.0
        %468 = vmatprep.subr.mxu0 0.0
        %469 = vmatpush1.msra.mxu0 0.0
        %470 = vmatprep.subr.mxu0 0.0
        %471 = vmatpush1.msra.mxu0 0.0
        %472 = vmatprep.subr.mxu0 0.0
        %473 = vmatpush1.msra.mxu0 0.0
        %474 = vmatprep.subr.mxu0 0.0
        %475 = vmatpush1.msra.mxu0 0.0
        %476 = vmatprep.subr.mxu0 0.0
        %477 = vmatpush1.msra.mxu0 0.0
        %478 = vmatprep.subr.mxu0 0.0
        %479 = vmatpush1.msra.mxu0 0.0
        %480 = vmatprep.subr.mxu0 0.0
        %481 = vmatpush1.msra.mxu0 0.0
        %482 = vmatprep.subr.mxu0 0.0
        %483 = vmatpush1.msra.mxu0 0.0
        %484 = vmatprep.subr.mxu0 0.0
        %485 = vmatpush1.msra.mxu0 0.0
        %486 = vmatprep.subr.mxu0 0.0
        %487 = vmatpush1.msra.mxu0 0.0
        %488 = vmatprep.subr.mxu0 0.0
        %489 = vmatpush1.msra.mxu0 0.0
        %490 = vmatprep.subr.mxu0 0.0
        %491 = vmatpush1.msra.mxu0 0.0
        %492 = vmatprep.subr.mxu0 0.0
        %493 = vmatpush1.msra.mxu0 0.0
        %494 = vmatprep.subr.mxu0 0.0
        %495 = vmatpush1.msra.mxu0 0.0
        %496 = vmatprep.mubr.f32.mxu0 0.0
        %497 = vmatmul.mubr.f32.gmra.mrb[0].mxu0 %v427
        %v498 = vpop.f32.mrb[0].mxu0
        %v499 = vadd.f32 0.0, %v498
        %v500 = vpop.f32.mrb[0].mxu0
        %v501 = vadd.f32 0.0, %v500
        %502 = vmatprep.mubr.f32.mxu0 0.0
        %503 = vmatmul.mubr.f32.gmra.mrb[0].mxu0 %v430
        %v504 = vpop.f32.mrb[0].mxu0
        %v505 = vadd.f32 0.0, %v504
        %v506 = vpop.f32.mrb[0].mxu0
        %v507 = vadd.f32 0.0, %v506
        %508 = vdwg.mxu0
        %509 = vmatprep.subr.mxu0 %v396
        %510 = vmatpush1.msra.mxu0 %v395
        %511 = vmatprep.subr.mxu0 %v400
        %512 = vmatpush1.msra.mxu0 %v399
        %513 = vmatprep.subr.mxu0 %v404
        %514 = vmatpush1.msra.mxu0 %v403
        %515 = vmatprep.subr.mxu0 %v408
        %516 = vmatpush1.msra.mxu0 %v407
        %517 = vmatprep.subr.mxu0 %v412
        %518 = vmatpush1.msra.mxu0 %v411
        %519 = vmatprep.subr.mxu0 %v416
        %520 = vmatpush1.msra.mxu0 %v415
        %521 = vmatprep.subr.mxu0 %v420
        %522 = vmatpush1.msra.mxu0 %v419
        %523 = vmatprep.subr.mxu0 %v424
        %524 = vmatpush1.msra.mxu0 %v423
        %525 = vmatprep.subr.mxu0 0.0
        %526 = vmatpush1.msra.mxu0 0.0
        %527 = vmatprep.subr.mxu0 0.0
        %528 = vmatpush1.msra.mxu0 0.0
        %529 = vmatprep.subr.mxu0 0.0
        %530 = vmatpush1.msra.mxu0 0.0
        %531 = vmatprep.subr.mxu0 0.0
        %532 = vmatpush1.msra.mxu0 0.0
        %533 = vmatprep.subr.mxu0 0.0
        %534 = vmatpush1.msra.mxu0 0.0
        %535 = vmatprep.subr.mxu0 0.0
        %536 = vmatpush1.msra.mxu0 0.0
        %537 = vmatprep.subr.mxu0 0.0
        %538 = vmatpush1.msra.mxu0 0.0
        %539 = vmatprep.subr.mxu0 0.0
        %540 = vmatpush1.msra.mxu0 0.0
        %541 = vmatprep.subr.mxu0 0.0
        %542 = vmatpush1.msra.mxu0 0.0
        %543 = vmatprep.subr.mxu0 0.0
        %544 = vmatpush1.msra.mxu0 0.0
        %545 = vmatprep.subr.mxu0 0.0
        %546 = vmatpush1.msra.mxu0 0.0
        %547 = vmatprep.subr.mxu0 0.0
        %548 = vmatpush1.msra.mxu0 0.0
        %549 = vmatprep.subr.mxu0 0.0
        %550 = vmatpush1.msra.mxu0 0.0
        %551 = vmatprep.subr.mxu0 0.0
        %552 = vmatpush1.msra.mxu0 0.0
        %553 = vmatprep.subr.mxu0 0.0
        %554 = vmatpush1.msra.mxu0 0.0
        %555 = vmatprep.subr.mxu0 0.0
        %556 = vmatpush1.msra.mxu0 0.0
        %557 = vmatprep.subr.mxu0 0.0
        %558 = vmatpush1.msra.mxu0 0.0
        %559 = vmatprep.subr.mxu0 0.0
        %560 = vmatpush1.msra.mxu0 0.0
        %561 = vmatprep.subr.mxu0 0.0
        %562 = vmatpush1.msra.mxu0 0.0
        %563 = vmatprep.subr.mxu0 0.0
        %564 = vmatpush1.msra.mxu0 0.0
        %565 = vmatprep.subr.mxu0 0.0
        %566 = vmatpush1.msra.mxu0 0.0
        %567 = vmatprep.subr.mxu0 0.0
        %568 = vmatpush1.msra.mxu0 0.0
        %569 = vmatprep.subr.mxu0 0.0
        %570 = vmatpush1.msra.mxu0 0.0
        %571 = vmatprep.subr.mxu0 0.0
        %572 = vmatpush1.msra.mxu0 0.0
        %573 = vmatprep.mubr.f32.mxu0 0.0
        %574 = vmatmul.mubr.f32.gmra.mrb[0].mxu0 %v427
        %v575 = vpop.f32.mrb[0].mxu0
        %v576 = vadd.f32 0.0, %v575
        %v577 = vpop.f32.mrb[0].mxu0
        %v578 = vadd.f32 0.0, %v577
        %579 = vmatprep.mubr.f32.mxu0 0.0
        %580 = vmatmul.mubr.f32.gmra.mrb[0].mxu0 %v430
        %v581 = vpop.f32.mrb[0].mxu0
        %v582 = vadd.f32 0.0, %v581
        %v583 = vpop.f32.mrb[0].mxu0
        %v584 = vadd.f32 0.0, %v583
        %585 = vdwg.mxu0
        %v586 = vmul.f32 %v499, %v375
        %v587 = vmul.f32 %v501, %v376
        %v588 = vmul.f32 %v576, %v377
        %v589 = vmul.f32 %v578, %v378
        %v590 = vmul.f32 %v505, %v375
        %v591 = vmul.f32 %v507, %v376
        %v592 = vmul.f32 %v582, %v377
        %v593 = vmul.f32 %v584, %v378
        %v594 = vrot.slane %v586, 4
        %v595 = vadd.f32 %v586, %v594
        %v596 = vrot.slane %v595, 2
        %v597 = vadd.f32 %v595, %v596
        %v598 = vrot.slane %v597, 1
        %v599 = vadd.f32 %v597, %v598
        %v600 = vrot.slane %v587, 4
        %v601 = vadd.f32 %v587, %v600
        %v602 = vrot.slane %v601, 2
        %v603 = vadd.f32 %v601, %v602
        %v604 = vrot.slane %v603, 1
        %v605 = vadd.f32 %v603, %v604
        %v606 = vrot.slane %v588, 4
        %v607 = vadd.f32 %v588, %v606
        %v608 = vrot.slane %v607, 2
        %v609 = vadd.f32 %v607, %v608
        %v610 = vrot.slane %v609, 1
        %v611 = vadd.f32 %v609, %v610
        %v612 = vrot.slane %v589, 4
        %v613 = vadd.f32 %v589, %v612
        %v614 = vrot.slane %v613, 2
        %v615 = vadd.f32 %v613, %v614
        %v616 = vrot.slane %v615, 1
        %v617 = vadd.f32 %v615, %v616
        %v618 = vrot.slane %v590, 4
        %v619 = vadd.f32 %v590, %v618
        %v620 = vrot.slane %v619, 2
        %v621 = vadd.f32 %v619, %v620
        %v622 = vrot.slane %v621, 1
        %v623 = vadd.f32 %v621, %v622
        %v624 = vrot.slane %v591, 4
        %v625 = vadd.f32 %v591, %v624
        %v626 = vrot.slane %v625, 2
        %v627 = vadd.f32 %v625, %v626
        %v628 = vrot.slane %v627, 1
        %v629 = vadd.f32 %v627, %v628
        %v630 = vrot.slane %v592, 4
        %v631 = vadd.f32 %v592, %v630
        %v632 = vrot.slane %v631, 2
        %v633 = vadd.f32 %v631, %v632
        %v634 = vrot.slane %v633, 1
        %v635 = vadd.f32 %v633, %v634
        %v636 = vrot.slane %v593, 4
        %v637 = vadd.f32 %v593, %v636
        %v638 = vrot.slane %v637, 2
        %v639 = vadd.f32 %v637, %v638
        %v640 = vrot.slane %v639, 1
        %v641 = vadd.f32 %v639, %v640
        %v642 = vld [vmem:[#allocation5] sm:$0xff]
        %v643 = vld [vmem:[#allocation5 + $0x8] sm:$0xff]
        %v644 = vld [vmem:[%s323] sm:$0xff]
        %v645 = vld [vmem:[%s323 + $0x8] sm:$0xff]
        %v646 = vld [vmem:[%s323 + $0x10] sm:$0xff]
        %v647 = vld [vmem:[%s323 + $0x18] sm:$0xff]
        %v648 = vld [vmem:[%s323 + $0x20] sm:$0xff]
        %v649 = vld [vmem:[%s323 + $0x28] sm:$0xff]
        %v650 = vld [vmem:[%s323 + $0x30] sm:$0xff]
        %v651 = vld [vmem:[%s323 + $0x38] sm:$0xff]
        %vm652 = vcmask 130048
        %v654 = vsel %vm652, %v642, 0
        %v657 = vsel %vm652, %v643, 0
        %659 = vmatprep.subr.mxu0 %v645
        %660 = vmatpush1.msra.mxu0 %v644
        %661 = vmatprep.subr.mxu0 %v649
        %662 = vmatpush1.msra.mxu0 %v648
        %663 = vmatprep.subr.mxu0 0.0
        %664 = vmatpush1.msra.mxu0 0.0
        %665 = vmatprep.subr.mxu0 0.0
        %666 = vmatpush1.msra.mxu0 0.0
        %667 = vmatprep.subr.mxu0 0.0
        %668 = vmatpush1.msra.mxu0 0.0
        %669 = vmatprep.subr.mxu0 0.0
        %670 = vmatpush1.msra.mxu0 0.0
        %671 = vmatprep.subr.mxu0 0.0
        %672 = vmatpush1.msra.mxu0 0.0
        %673 = vmatprep.subr.mxu0 0.0
        %674 = vmatpush1.msra.mxu0 0.0
        %675 = vmatprep.subr.mxu0 0.0
        %676 = vmatpush1.msra.mxu0 0.0
        %677 = vmatprep.subr.mxu0 0.0
        %678 = vmatpush1.msra.mxu0 0.0
        %679 = vmatprep.subr.mxu0 0.0
        %680 = vmatpush1.msra.mxu0 0.0
        %681 = vmatprep.subr.mxu0 0.0
        %682 = vmatpush1.msra.mxu0 0.0
        %683 = vmatprep.subr.mxu0 0.0
        %684 = vmatpush1.msra.mxu0 0.0
        %685 = vmatprep.subr.mxu0 0.0
        %686 = vmatpush1.msra.mxu0 0.0
        %687 = vmatprep.subr.mxu0 0.0
        %688 = vmatpush1.msra.mxu0 0.0
        %689 = vmatprep.subr.mxu0 0.0
        %690 = vmatpush1.msra.mxu0 0.0
        %691 = vmatprep.subr.mxu0 0.0
        %692 = vmatpush1.msra.mxu0 0.0
        %693 = vmatprep.subr.mxu0 0.0
        %694 = vmatpush1.msra.mxu0 0.0
        %695 = vmatprep.subr.mxu0 0.0
        %696 = vmatpush1.msra.mxu0 0.0
        %697 = vmatprep.subr.mxu0 0.0
        %698 = vmatpush1.msra.mxu0 0.0
        %699 = vmatprep.subr.mxu0 0.0
        %700 = vmatpush1.msra.mxu0 0.0
        %701 = vmatprep.subr.mxu0 0.0
        %702 = vmatpush1.msra.mxu0 0.0
        %703 = vmatprep.subr.mxu0 0.0
        %704 = vmatpush1.msra.mxu0 0.0
        %705 = vmatprep.subr.mxu0 0.0
        %706 = vmatpush1.msra.mxu0 0.0
        %707 = vmatprep.subr.mxu0 0.0
        %708 = vmatpush1.msra.mxu0 0.0
        %709 = vmatprep.subr.mxu0 0.0
        %710 = vmatpush1.msra.mxu0 0.0
        %711 = vmatprep.subr.mxu0 0.0
        %712 = vmatpush1.msra.mxu0 0.0
        %713 = vmatprep.subr.mxu0 0.0
        %714 = vmatpush1.msra.mxu0 0.0
        %715 = vmatprep.subr.mxu0 0.0
        %716 = vmatpush1.msra.mxu0 0.0
        %717 = vmatprep.subr.mxu0 0.0
        %718 = vmatpush1.msra.mxu0 0.0
        %719 = vmatprep.subr.mxu0 0.0
        %720 = vmatpush1.msra.mxu0 0.0
        %721 = vmatprep.subr.mxu0 0.0
        %722 = vmatpush1.msra.mxu0 0.0
        %723 = vmatprep.mubr.f32.mxu0 0.0
        %724 = vmatmul.mubr.f32.gmra.mrb[0].mxu0 %v654
        %v725 = vpop.f32.mrb[0].mxu0
        %v726 = vadd.f32 0.0, %v725
        %v727 = vpop.f32.mrb[0].mxu0
        %v728 = vadd.f32 0.0, %v727
        %729 = vmatprep.mubr.f32.mxu0 0.0
        %730 = vmatmul.mubr.f32.gmra.mrb[0].mxu0 %v657
        %v731 = vpop.f32.mrb[0].mxu0
        %v732 = vadd.f32 0.0, %v731
        %v733 = vpop.f32.mrb[0].mxu0
        %v734 = vadd.f32 0.0, %v733
        %735 = vdwg.mxu0
        %736 = vmatprep.subr.mxu0 %v647
        %737 = vmatpush1.msra.mxu0 %v646
        %738 = vmatprep.subr.mxu0 %v651
        %739 = vmatpush1.msra.mxu0 %v650
        %740 = vmatprep.subr.mxu0 0.0
        %741 = vmatpush1.msra.mxu0 0.0
        %742 = vmatprep.subr.mxu0 0.0
        %743 = vmatpush1.msra.mxu0 0.0
        %744 = vmatprep.subr.mxu0 0.0
        %745 = vmatpush1.msra.mxu0 0.0
        %746 = vmatprep.subr.mxu0 0.0
        %747 = vmatpush1.msra.mxu0 0.0
        %748 = vmatprep.subr.mxu0 0.0
        %749 = vmatpush1.msra.mxu0 0.0
        %750 = vmatprep.subr.mxu0 0.0
        %751 = vmatpush1.msra.mxu0 0.0
        %752 = vmatprep.subr.mxu0 0.0
        %753 = vmatpush1.msra.mxu0 0.0
        %754 = vmatprep.subr.mxu0 0.0
        %755 = vmatpush1.msra.mxu0 0.0
        %756 = vmatprep.subr.mxu0 0.0
        %757 = vmatpush1.msra.mxu0 0.0
        %758 = vmatprep.subr.mxu0 0.0
        %759 = vmatpush1.msra.mxu0 0.0
        %760 = vmatprep.subr.mxu0 0.0
        %761 = vmatpush1.msra.mxu0 0.0
        %762 = vmatprep.subr.mxu0 0.0
        %763 = vmatpush1.msra.mxu0 0.0
        %764 = vmatprep.subr.mxu0 0.0
        %765 = vmatpush1.msra.mxu0 0.0
        %766 = vmatprep.subr.mxu0 0.0
        %767 = vmatpush1.msra.mxu0 0.0
        %768 = vmatprep.subr.mxu0 0.0
        %769 = vmatpush1.msra.mxu0 0.0
        %770 = vmatprep.subr.mxu0 0.0
        %771 = vmatpush1.msra.mxu0 0.0
        %772 = vmatprep.subr.mxu0 0.0
        %773 = vmatpush1.msra.mxu0 0.0
        %774 = vmatprep.subr.mxu0 0.0
        %775 = vmatpush1.msra.mxu0 0.0
        %776 = vmatprep.subr.mxu0 0.0
        %777 = vmatpush1.msra.mxu0 0.0
        %778 = vmatprep.subr.mxu0 0.0
        %779 = vmatpush1.msra.mxu0 0.0
        %780 = vmatprep.subr.mxu0 0.0
        %781 = vmatpush1.msra.mxu0 0.0
        %782 = vmatprep.subr.mxu0 0.0
        %783 = vmatpush1.msra.mxu0 0.0
        %784 = vmatprep.subr.mxu0 0.0
        %785 = vmatpush1.msra.mxu0 0.0
        %786 = vmatprep.subr.mxu0 0.0
        %787 = vmatpush1.msra.mxu0 0.0
        %788 = vmatprep.subr.mxu0 0.0
        %789 = vmatpush1.msra.mxu0 0.0
        %790 = vmatprep.subr.mxu0 0.0
        %791 = vmatpush1.msra.mxu0 0.0
        %792 = vmatprep.subr.mxu0 0.0
        %793 = vmatpush1.msra.mxu0 0.0
        %794 = vmatprep.subr.mxu0 0.0
        %795 = vmatpush1.msra.mxu0 0.0
        %796 = vmatprep.subr.mxu0 0.0
        %797 = vmatpush1.msra.mxu0 0.0
        %798 = vmatprep.subr.mxu0 0.0
        %799 = vmatpush1.msra.mxu0 0.0
        %800 = vmatprep.mubr.f32.mxu0 0.0
        %801 = vmatmul.mubr.f32.gmra.mrb[0].mxu0 %v654
        %v802 = vpop.f32.mrb[0].mxu0
        %v803 = vadd.f32 0.0, %v802
        %v804 = vpop.f32.mrb[0].mxu0
        %v805 = vadd.f32 0.0, %v804
        %806 = vmatprep.mubr.f32.mxu0 0.0
        %807 = vmatmul.mubr.f32.gmra.mrb[0].mxu0 %v657
        %v808 = vpop.f32.mrb[0].mxu0
        %v809 = vadd.f32 0.0, %v808
        %v810 = vpop.f32.mrb[0].mxu0
        %v811 = vadd.f32 0.0, %v810
        %812 = vdwg.mxu0
        %v813 = vmul.f32 %v726, %v379
        %v814 = vmul.f32 %v728, %v380
        %v815 = vmul.f32 %v803, %v381
        %v816 = vmul.f32 %v805, %v382
        %v817 = vmul.f32 %v732, %v379
        %v818 = vmul.f32 %v734, %v380
        %v819 = vmul.f32 %v809, %v381
        %v820 = vmul.f32 %v811, %v382
        %v821 = vrot.slane %v813, 4
        %v822 = vadd.f32 %v813, %v821
        %v823 = vrot.slane %v822, 2
        %v824 = vadd.f32 %v822, %v823
        %v825 = vrot.slane %v824, 1
        %v826 = vadd.f32 %v824, %v825
        %v827 = vrot.slane %v814, 4
        %v828 = vadd.f32 %v814, %v827
        %v829 = vrot.slane %v828, 2
        %v830 = vadd.f32 %v828, %v829
        %v831 = vrot.slane %v830, 1
        %v832 = vadd.f32 %v830, %v831
        %v833 = vrot.slane %v815, 4
        %v834 = vadd.f32 %v815, %v833
        %v835 = vrot.slane %v834, 2
        %v836 = vadd.f32 %v834, %v835
        %v837 = vrot.slane %v836, 1
        %v838 = vadd.f32 %v836, %v837
        %v839 = vrot.slane %v816, 4
        %v840 = vadd.f32 %v816, %v839
        %v841 = vrot.slane %v840, 2
        %v842 = vadd.f32 %v840, %v841
        %v843 = vrot.slane %v842, 1
        %v844 = vadd.f32 %v842, %v843
        %v845 = vrot.slane %v817, 4
        %v846 = vadd.f32 %v817, %v845
        %v847 = vrot.slane %v846, 2
        %v848 = vadd.f32 %v846, %v847
        %v849 = vrot.slane %v848, 1
        %v850 = vadd.f32 %v848, %v849
        %v851 = vrot.slane %v818, 4
        %v852 = vadd.f32 %v818, %v851
        %v853 = vrot.slane %v852, 2
        %v854 = vadd.f32 %v852, %v853
        %v855 = vrot.slane %v854, 1
        %v856 = vadd.f32 %v854, %v855
        %v857 = vrot.slane %v819, 4
        %v858 = vadd.f32 %v819, %v857
        %v859 = vrot.slane %v858, 2
        %v860 = vadd.f32 %v858, %v859
        %v861 = vrot.slane %v860, 1
        %v862 = vadd.f32 %v860, %v861
        %v863 = vrot.slane %v820, 4
        %v864 = vadd.f32 %v820, %v863
        %v865 = vrot.slane %v864, 2
        %v866 = vadd.f32 %v864, %v865
        %v867 = vrot.slane %v866, 1
        %v868 = vadd.f32 %v866, %v867
        %v869 = vadd.f32 %v599, %v826
        %v870 = vadd.f32 %v605, %v832
        %v871 = vadd.f32 %v611, %v838
        %v872 = vadd.f32 %v617, %v844
        %v873 = vadd.f32 %v623, %v850
        %v874 = vadd.f32 %v629, %v856
        %v875 = vadd.f32 %v635, %v862
        %v876 = vadd.f32 %v641, %v868
        %v877 = vld [vmem:[%s2] sm:$0x3]
        %vm878 = vcmask 72704
        %v880 = vsel %vm878, %v877, 0
        %vm882 = vcmask 1040384
        %v884 = vsel %vm882, %v387, 0
        %v887 = vsel %vm882, %v388, 0
        %v890 = vsel %vm882, %v389, 0
        %v893 = vsel %vm882, %v390, 0
        %895 = vmatprep.subr.mxu0 %v384
        %896 = vmatpush1.msra.mxu0 %v383
        %897 = vmatprep.subr.mxu0 %v887
        %898 = vmatpush1.msra.mxu0 %v884
        %899 = vmatprep.subr.mxu0 0.0
        %900 = vmatpush1.msra.mxu0 0.0
        %901 = vmatprep.subr.mxu0 0.0
        %902 = vmatpush1.msra.mxu0 0.0
        %903 = vmatprep.subr.mxu0 0.0
        %904 = vmatpush1.msra.mxu0 0.0
        %905 = vmatprep.subr.mxu0 0.0
        %906 = vmatpush1.msra.mxu0 0.0
        %907 = vmatprep.subr.mxu0 0.0
        %908 = vmatpush1.msra.mxu0 0.0
        %909 = vmatprep.subr.mxu0 0.0
        %910 = vmatpush1.msra.mxu0 0.0
        %911 = vmatprep.subr.mxu0 0.0
        %912 = vmatpush1.msra.mxu0 0.0
        %913 = vmatprep.subr.mxu0 0.0
        %914 = vmatpush1.msra.mxu0 0.0
        %915 = vmatprep.subr.mxu0 0.0
        %916 = vmatpush1.msra.mxu0 0.0
        %917 = vmatprep.subr.mxu0 0.0
        %918 = vmatpush1.msra.mxu0 0.0
        %919 = vmatprep.subr.mxu0 0.0
        %920 = vmatpush1.msra.mxu0 0.0
        %921 = vmatprep.subr.mxu0 0.0
        %922 = vmatpush1.msra.mxu0 0.0
        %923 = vmatprep.subr.mxu0 0.0
        %924 = vmatpush1.msra.mxu0 0.0
        %925 = vmatprep.subr.mxu0 0.0
        %926 = vmatpush1.msra.mxu0 0.0
        %927 = vmatprep.subr.mxu0 0.0
        %928 = vmatpush1.msra.mxu0 0.0
        %929 = vmatprep.subr.mxu0 0.0
        %930 = vmatpush1.msra.mxu0 0.0
        %931 = vmatprep.subr.mxu0 0.0
        %932 = vmatpush1.msra.mxu0 0.0
        %933 = vmatprep.subr.mxu0 0.0
        %934 = vmatpush1.msra.mxu0 0.0
        %935 = vmatprep.subr.mxu0 0.0
        %936 = vmatpush1.msra.mxu0 0.0
        %937 = vmatprep.subr.mxu0 0.0
        %938 = vmatpush1.msra.mxu0 0.0
        %939 = vmatprep.subr.mxu0 0.0
        %940 = vmatpush1.msra.mxu0 0.0
        %941 = vmatprep.subr.mxu0 0.0
        %942 = vmatpush1.msra.mxu0 0.0
        %943 = vmatprep.subr.mxu0 0.0
        %944 = vmatpush1.msra.mxu0 0.0
        %945 = vmatprep.subr.mxu0 0.0
        %946 = vmatpush1.msra.mxu0 0.0
        %947 = vmatprep.subr.mxu0 0.0
        %948 = vmatpush1.msra.mxu0 0.0
        %949 = vmatprep.subr.mxu0 0.0
        %950 = vmatpush1.msra.mxu0 0.0
        %951 = vmatprep.subr.mxu0 0.0
        %952 = vmatpush1.msra.mxu0 0.0
        %953 = vmatprep.subr.mxu0 0.0
        %954 = vmatpush1.msra.mxu0 0.0
        %955 = vmatprep.subr.mxu0 0.0
        %956 = vmatpush1.msra.mxu0 0.0
        %957 = vmatprep.subr.mxu0 0.0
        %958 = vmatpush1.msra.mxu0 0.0
        %959 = vmatprep.mubr.f32.mxu0 0.0
        %960 = vmatmul.mubr.f32.gmra.mrb[0].mxu0 %v880
        %v961 = vpop.f32.mrb[0].mxu0
        %v962 = vadd.f32 0.0, %v961
        %v963 = vpop.f32.mrb[0].mxu0
        %v964 = vadd.f32 0.0, %v963
        %965 = vdwg.mxu0
        %966 = vmatprep.subr.mxu0 %v386
        %967 = vmatpush1.msra.mxu0 %v385
        %968 = vmatprep.subr.mxu0 %v893
        %969 = vmatpush1.msra.mxu0 %v890
        %970 = vmatprep.subr.mxu0 0.0
        %971 = vmatpush1.msra.mxu0 0.0
        %972 = vmatprep.subr.mxu0 0.0
        %973 = vmatpush1.msra.mxu0 0.0
        %974 = vmatprep.subr.mxu0 0.0
        %975 = vmatpush1.msra.mxu0 0.0
        %976 = vmatprep.subr.mxu0 0.0
        %977 = vmatpush1.msra.mxu0 0.0
        %978 = vmatprep.subr.mxu0 0.0
        %979 = vmatpush1.msra.mxu0 0.0
        %980 = vmatprep.subr.mxu0 0.0
        %981 = vmatpush1.msra.mxu0 0.0
        %982 = vmatprep.subr.mxu0 0.0
        %983 = vmatpush1.msra.mxu0 0.0
        %984 = vmatprep.subr.mxu0 0.0
        %985 = vmatpush1.msra.mxu0 0.0
        %986 = vmatprep.subr.mxu0 0.0
        %987 = vmatpush1.msra.mxu0 0.0
        %988 = vmatprep.subr.mxu0 0.0
        %989 = vmatpush1.msra.mxu0 0.0
        %990 = vmatprep.subr.mxu0 0.0
        %991 = vmatpush1.msra.mxu0 0.0
        %992 = vmatprep.subr.mxu0 0.0
        %993 = vmatpush1.msra.mxu0 0.0
        %994 = vmatprep.subr.mxu0 0.0
        %995 = vmatpush1.msra.mxu0 0.0
        %996 = vmatprep.subr.mxu0 0.0
        %997 = vmatpush1.msra.mxu0 0.0
        %998 = vmatprep.subr.mxu0 0.0
        %999 = vmatpush1.msra.mxu0 0.0
        %1000 = vmatprep.subr.mxu0 0.0
        %1001 = vmatpush1.msra.mxu0 0.0
        %1002 = vmatprep.subr.mxu0 0.0
        %1003 = vmatpush1.msra.mxu0 0.0
        %1004 = vmatprep.subr.mxu0 0.0
        %1005 = vmatpush1.msra.mxu0 0.0
        %1006 = vmatprep.subr.mxu0 0.0
        %1007 = vmatpush1.msra.mxu0 0.0
        %1008 = vmatprep.subr.mxu0 0.0
        %1009 = vmatpush1.msra.mxu0 0.0
        %1010 = vmatprep.subr.mxu0 0.0
        %1011 = vmatpush1.msra.mxu0 0.0
        %1012 = vmatprep.subr.mxu0 0.0
        %1013 = vmatpush1.msra.mxu0 0.0
        %1014 = vmatprep.subr.mxu0 0.0
        %1015 = vmatpush1.msra.mxu0 0.0
        %1016 = vmatprep.subr.mxu0 0.0
        %1017 = vmatpush1.msra.mxu0 0.0
        %1018 = vmatprep.subr.mxu0 0.0
        %1019 = vmatpush1.msra.mxu0 0.0
        %1020 = vmatprep.subr.mxu0 0.0
        %1021 = vmatpush1.msra.mxu0 0.0
        %1022 = vmatprep.subr.mxu0 0.0
        %1023 = vmatpush1.msra.mxu0 0.0
        %1024 = vmatprep.subr.mxu0 0.0
        %1025 = vmatpush1.msra.mxu0 0.0
        %1026 = vmatprep.subr.mxu0 0.0
        %1027 = vmatpush1.msra.mxu0 0.0
        %1028 = vmatprep.subr.mxu0 0.0
        %1029 = vmatpush1.msra.mxu0 0.0
        %1030 = vmatprep.mubr.f32.mxu0 0.0
        %1031 = vmatmul.mubr.f32.gmra.mrb[0].mxu0 %v880
        %v1032 = vpop.f32.mrb[0].mxu0
        %v1033 = vadd.f32 0.0, %v1032
        %v1034 = vpop.f32.mrb[0].mxu0
        %v1035 = vadd.f32 0.0, %v1034
        %1036 = vdwg.mxu0
        %v1041 = vrot.slane %v962, 1
        %v1042 = vrot.slane %v964, 1
        %v1043 = vrot.slane %v1033, 1
        %v1044 = vrot.slane %v1035, 1
        %v1053 = vadd.f32 %v869, %v962
        %v1054 = vadd.f32 %v870, %v964
        %v1055 = vadd.f32 %v871, %v1033
        %v1056 = vadd.f32 %v872, %v1035
        %v1057 = vadd.f32 %v873, %v1041
        %v1058 = vadd.f32 %v874, %v1042
        %v1059 = vadd.f32 %v875, %v1043
        %v1060 = vadd.f32 %v876, %v1044
        %v1069 = vcombine.low %v1053, %v1054
        %v1070 = vcombine.low %v1055, %v1056
        %v1072 = vunpack.c.l.s4 1983009808
        %v1073 = vunpack.c.0.s8 %v1072
        %v1074 = vlaneseq
        %v1075 = vshrl.u32 %v1074, 7
        %v1076 = vsub.s32 %v1073, %v1075
        %v1077 = vrot.slane %v1069, %v1076
        %v1079 = vunpack.c.l.s4 1983009808
        %v1080 = vunpack.c.0.s8 %v1079
        %v1081 = vlaneseq
        %v1082 = vshrl.u32 %v1081, 7
        %v1083 = vsub.s32 %v1080, %v1082
        %v1084 = vrot.slane %v1070, %v1083
        %v1085 = vcombine.low %v1077, %v1084
        %v1086 = vcombine.low %v1057, %v1058
        %v1087 = vcombine.low %v1059, %v1060
        %v1089 = vunpack.c.l.s4 1983009808
        %v1090 = vunpack.c.0.s8 %v1089
        %v1091 = vlaneseq
        %v1092 = vshrl.u32 %v1091, 7
        %v1093 = vsub.s32 %v1090, %v1092
        %v1094 = vrot.slane %v1086, %v1093
        %v1096 = vunpack.c.l.s4 1983009808
        %v1097 = vunpack.c.0.s8 %v1096
        %v1098 = vlaneseq
        %v1099 = vshrl.u32 %v1098, 7
        %v1100 = vsub.s32 %v1097, %v1099
        %v1101 = vrot.slane %v1087, %v1100
        %v1102 = vcombine.low %v1094, %v1101
        %vm1103 = vcmask 1044484
        %v1104 = vsel %vm1103, %v1085, %v1085
        %vm1105 = vcmask 1046534
        %v1106 = vsel %vm1105, %v1085, %v1104
        %v1107 = vrot.slane %v1102, 7
        %vm1108 = vcmask 1041409
        %v1109 = vsel %vm1108, %v1107, %v1106
        %vm1110 = vcmask 1043459
        %v1111 = vsel %vm1110, %v1107, %v1109
        %vm1112 = vcmask 1045509
        %v1113 = vsel %vm1112, %v1107, %v1111
        %vm1114 = vcmask 1047559
        %v1115 = vsel %vm1114, %v1107, %v1113
        %1117 = vst [vmem:[%s370] sm:$0xff] %v1115
        %s1118 = sand.u32 %s171, 1
        %s1119 = scalar_lea.sflag [#allocation4], %s1118
        %s1120 = sand.u32 %s171, 1
        %s1121 = smul.addr %s1120, 8
        %s1122 = scalar_lea.vmem [#allocation10], %s1121
        // Predicated region
        $region65: #{tpu_custom_call.1} parent=43 // pred_check
          %p1123 = pneg %p181
        $region66: #{tpu_custom_call.1} parent=43 // pred_check_branch
          %1125 = sbr.rel (%p1123) target = $region68
        $region67: #{tpu_custom_call.1} parent=43 // pred_region
          %s1126 = smul.u32 4, %s22
          %s1128 = ssub.s32 128, 128
          %1129 = vsyncadd %s1119, %s1128
          %s1130 = smul.addr %s1126, 32
          %s1131 = scalar_lea.hbm %s6, %s1130
          %s1133 = sshll.u32 %s1122, 4
          %s1134 = int_to_ptr.vmem [resolvable:$true] %s1133
          %1136 = dma.vmem_to_hbm [thread:$0]  %s1134, 128, %s1131, %s1119
        $region68: #{tpu_custom_call.1} parent=43 // pred_fallthru
          _
      $region44: #{tpu_custom_call.1} parent=5 // pred_fallthru
        _
      %p1137 = scmp.le.s32.totalorder 2, %s17
      // Predicated region
      $region69: #{tpu_custom_call.1} parent=5 // pred_check
        %p1138 = pneg %p1137
      $region70: #{tpu_custom_call.1} parent=5 // pred_check_branch
        %1140 = sbr.rel (%p1138) target = $region72
      $region71: #{tpu_custom_call.1} parent=5 // pred_region
        %s1141 = ssub.s32 %s17, 2
        // Predicated region
        $region73: #{tpu_custom_call.1} parent=71 // pred_check
          %p1142 = pneg %p187
        $region74: #{tpu_custom_call.1} parent=71 // pred_check_branch
          %1144 = sbr.rel (%p1142) target = $region76
        $region75: #{tpu_custom_call.1} parent=71 // pred_region
          %s1145 = sand.u32 %s172, 1
          %s1146 = scalar_lea.sflag [#allocation4], %s1145
          %s1147 = sand.u32 %s172, 1
          %s1148 = smul.addr %s1147, 8
          %s1149 = scalar_lea.vmem [#allocation10], %s1148
          %1150 = dma.done %s1146, 128
        $region76: #{tpu_custom_call.1} parent=71 // pred_fallthru
          _
      $region72: #{tpu_custom_call.1} parent=5 // pred_fallthru
        _
    $region6: #{tpu_custom_call.1} parent=1 // loop_footer
      %s21 = sadd.s32 1, %s17
    $region7: #{tpu_custom_call.1} parent=1 // loop_footer_branch
      %16 = sbr.rel target = $region3
    $region8: #{tpu_custom_call.1} parent=1 // loop_exit
      _
    %1151 = vsyncpa [#allocation3], 1
    %s1152 = scalar_lea.sflag [#allocation3], 1
    %1153 = vsyncpa %s1152, 1
    %1154 = vsyncpa [#allocation6], 1
    %1155 = vsyncpa [#allocation4], 1
    %s1156 = scalar_lea.sflag [#allocation4], 1
    %1157 = vsyncpa %s1156, 1

</llo_original>
